<compile_context>
chip_gen: v5e
topology: v5e:2x2
jax: 0.10.0
libtpu: 0.0.40
codegen_flags: <defaults>
</compile_context>

<pallas_src>
import jax
import jax.numpy as jnp
import numpy as np
from jax.experimental import pallas as pl
from jax.experimental.pallas import tpu as pltpu

LANE = 128
SUBLANE = 8


def _round_up(x: int, m: int) -> int:
    return ((x + m - 1) // m) * m


def _largest_divisor_leq(n: int, m: int) -> int:
    for t in range(min(m, n), 0, -1):
        if n % t == 0:
            return t
    return 1


def _vmem_budgets():
    """Per-pipeline-step VMEM budget and scoped-VMEM limit, gated on the chip.

    v5e/v6e: 128 MiB VMEM per TensorCore -> 12 MiB/step budget, 64 MiB limit.
    v7x:      64 MiB VMEM per TensorCore ->  8 MiB/step budget, 48 MiB limit.
    """
    try:
        cap = int(pltpu.get_tpu_info().vmem_capacity_bytes)
    except Exception:
        cap = 64 * 1024 * 1024  # conservative (v7x-sized) fallback
    step_budget = min(12 * 1024 * 1024, cap // 8)
    vmem_limit = min(64 * 1024 * 1024, (cap // 4) * 3)
    return step_budget, vmem_limit


def _choose_batch_tile(B: int, per_row_bytes: int, step_budget: int, block_b):
    """Pick a batch tile.  Prefers a divisor of B (no padding / no HBM copy)."""
    if block_b is not None:
        desired = max(1, int(block_b))
    else:
        desired = max(8, min(2048, (step_budget // per_row_bytes) // 8 * 8))
        # Give the pipeline (and v7x's two TensorCores) at least 2 tiles.
        if B >= 16:
            desired = min(desired, _round_up((B + 1) // 2, 8))
    desired = max(1, min(desired, B))

    tb = _largest_divisor_leq(B, desired)
    if tb * 4 >= desired:
        return tb, B  # copy-free: tb divides B exactly
    # Rare fallback (e.g. large prime B): pad the batch rather than shrinking
    # the tile too far.  TODO(synk): replace with a main+tail pallas_call pair.
    return desired, _round_up(B, desired)


def attention_kernel(q_ref, k_ref, v_ref, o_ref):
    q = q_ref[...].astype(jnp.float32)  # (tb, 1, D)
    k = k_ref[...].astype(jnp.float32)  # (tb, S, D)
    v = v_ref[...].astype(jnp.float32)  # (tb, S, Dv)

    # Dot-product scorer: VPU multiply + lane (XLU) reduce, f32 accumulation.
    scores = jnp.sum(q * k, axis=-1, keepdims=True)               # (tb, S, 1)

    # Shift-invariant exp/normalise (max shift == mean shift after the ratio).
    scores = scores - jnp.max(scores, axis=1, keepdims=True)
    scores = jnp.exp(scores)                                      # EUP
    convex = scores / jnp.sum(scores, axis=1, keepdims=True)      # exact divide

    # einsum('bs,bsi->bi') as VPU multiply + sublane (XLU) reduce — avoids
    # M=1 MXU matmuls; exact f32 accumulation.
    out = jnp.sum(convex * v, axis=1, keepdims=True)              # (tb, 1, Dv)
    o_ref[...] = out.astype(o_ref.dtype)


def attention(query, keys, values=None, *, block_b=None):
    if values is None:
        values = keys
    B, D = query.shape
    _, S, Dv = values.shape
    dtype = query.dtype
    itemsize = jnp.dtype(dtype).itemsize

    # --- VMEM accounting (tiles are lane/sublane padded in VMEM, not in HBM) --
    d_l, dv_l, s_l = _round_up(D, LANE), _round_up(Dv, LANE), _round_up(S, SUBLANE)
    io_row = (d_l + s_l * d_l + s_l * dv_l + dv_l) * itemsize      # one buffer set
    tmp_row = (2 * s_l * (d_l + dv_l) + 8 * LANE + 2 * dv_l) * 4   # f32 temporaries
    per_row_bytes = 2 * io_row + tmp_row                           # double-buffered I/O + temps

    step_budget, vmem_limit = _vmem_budgets()
    tb, B_pad = _choose_batch_tile(B, per_row_bytes, step_budget, block_b)
    grid = (B_pad // tb,)

    # Query/output viewed as (B, 1, D)/(B, 1, Dv): free reshape, and it puts the
    # batch tile in a leading block dim so any tb is layout-legal (last two
    # block dims equal the full array dims).
    q3 = query.reshape(B, 1, D)
    k3, v3 = keys, values
    if B_pad != B:  # rare fallback only; padded rows give zero outputs, sliced off
        q3 = jnp.pad(q3, ((0, B_pad - B), (0, 0), (0, 0)))
        k3 = jnp.pad(k3, ((0, B_pad - B), (0, 0), (0, 0)))
        v3 = jnp.pad(v3, ((0, B_pad - B), (0, 0), (0, 0)))

    # Advisory cost estimate from the real (unpadded) shapes.
    flops = 2 * B * S * D + 2 * B * S * Dv
    bytes_accessed = (B * D + B * S * D + B * S * Dv + B * Dv) * itemsize
    cost = pl.CostEstimate(flops=flops, transcendentals=B * S,
                           bytes_accessed=bytes_accessed)

    out3 = pl.pallas_call(
        attention_kernel,
        out_shape=jax.ShapeDtypeStruct((B_pad, 1, Dv), dtype),
        grid=grid,
        in_specs=[
            pl.BlockSpec((tb, 1, D), lambda i: (i, 0, 0)),
            pl.BlockSpec((tb, S, D), lambda i: (i, 0, 0)),
            pl.BlockSpec((tb, S, Dv), lambda i: (i, 0, 0)),
        ],
        out_specs=pl.BlockSpec((tb, 1, Dv), lambda i: (i, 0, 0)),
        compiler_params=pltpu.CompilerParams(
            dimension_semantics=("parallel",),
            vmem_limit_bytes=vmem_limit),
        cost_estimate=cost,
    )(q3, k3, v3)

    out = out3.reshape(B_pad, Dv)
    return out[:B] if B_pad != B else out


def attention_ref(query, keys, values=None):
    """Float64 NumPy reference mirroring the PyTorch forward exactly."""
    if values is None:
        values = keys
    q = np.asarray(query, dtype=np.float64)
    k = np.asarray(keys, dtype=np.float64)
    v = np.asarray(values, dtype=np.float64)
    scores = np.einsum('bd,bsd->bs', q, k)
    scores = scores - scores.mean(axis=1, keepdims=True)
    scores = np.exp(scores)
    convex = scores / scores.sum(axis=1, keepdims=True)
    return np.einsum('bs,bsi->bi', convex, v)


if __name__ == "__main__":
    root = jax.random.PRNGKey(0)
    kq, kk, kv, k2q, k2k, k3q, k3k = jax.random.split(root, 7)

    # 1) Small shapes consistent with the module's forward, explicit values.
    B, S, D = 2, 8, 32
    query = jax.random.normal(kq, (B, D), dtype=jnp.float32)
    keys_ = jax.random.normal(kk, (B, S, D), dtype=jnp.float32)
    values = jax.random.normal(kv, (B, S, D), dtype=jnp.float32)
    out = jax.block_until_ready(attention(query, keys_, values))
    ref = attention_ref(query, keys_, values)
    assert out.shape == (B, D)
    assert np.allclose(np.asarray(out), ref, atol=2e-3, rtol=2e-3), "mismatch"

    # 2) Multi-tile, copy-free path (tile=5 divides B=20), values defaulting to keys.
    B2, S2, D2 = 20, 8, 32
    qa = jax.random.normal(k2q, (B2, D2), dtype=jnp.float32)
    ka = jax.random.normal(k2k, (B2, S2, D2), dtype=jnp.float32)
    out2 = jax.block_until_ready(attention(qa, ka, block_b=8))
    ref2 = attention_ref(qa, ka)
    assert out2.shape == (B2, D2)
    assert np.allclose(np.asarray(out2), ref2, atol=2e-3, rtol=2e-3), "mismatch (tiled path)"

    # 3) Prime batch size -> exercises the rare padded-batch fallback path.
    B3, S3, D3 = 23, 8, 32
    qb = jax.random.normal(k3q, (B3, D3), dtype=jnp.float32)
    kb = jax.random.normal(k3k, (B3, S3, D3), dtype=jnp.float32)
    out3 = jax.block_until_ready(attention(qb, kb, block_b=8))
    ref3 = attention_ref(qb, kb)
    assert out3.shape == (B3, D3)
    assert np.allclose(np.asarray(out3), ref3, atol=2e-3, rtol=2e-3), "mismatch (padded path)"

    print("KERNEL_OK")
</pallas_src>

<mosaic_0001>
module attributes {stable_mosaic.version = 11 : i64} {
  func.func @attention_kernel(%arg0: i32, %arg1: memref<2x1x32xf32, #tpu.memory_space<vmem>>, %arg2: memref<2x8x32xf32, #tpu.memory_space<vmem>>, %arg3: memref<2x8x32xf32, #tpu.memory_space<vmem>>, %arg4: memref<2x1x32xf32, #tpu.memory_space<vmem>>) attributes {dimension_semantics = [#tpu.dimension_semantics<parallel>], iteration_bounds = array<i64: 1>, scalar_prefetch = 0 : i64, scratch_operands = 0 : i64, tpu.core_type = #tpu.core_type<tc>, window_params = [{transform_indices = @transform_0, window_bounds = array<i64: 2, 1, 32>}, {transform_indices = @transform_1, window_bounds = array<i64: 2, 8, 32>}, {transform_indices = @transform_2, window_bounds = array<i64: 2, 8, 32>}, {transform_indices = @transform_3, window_bounds = array<i64: 2, 1, 32>}]} {
    %c0 = arith.constant 0 : index
    %c0_0 = arith.constant 0 : index
    %c0_1 = arith.constant 0 : index
    %0 = vector.load %arg1[%c0, %c0_0, %c0_1] : memref<2x1x32xf32, #tpu.memory_space<vmem>>, vector<2x1x32xf32>
    %c0_2 = arith.constant 0 : index
    %c0_3 = arith.constant 0 : index
    %c0_4 = arith.constant 0 : index
    %1 = vector.load %arg2[%c0_2, %c0_3, %c0_4] : memref<2x8x32xf32, #tpu.memory_space<vmem>>, vector<2x8x32xf32>
    %c0_5 = arith.constant 0 : index
    %c0_6 = arith.constant 0 : index
    %c0_7 = arith.constant 0 : index
    %2 = vector.load %arg3[%c0_5, %c0_6, %c0_7] : memref<2x8x32xf32, #tpu.memory_space<vmem>>, vector<2x8x32xf32>
    %3 = vector.broadcast %0 : vector<2x1x32xf32> to vector<2x8x32xf32>
    %4 = arith.mulf %3, %1 : vector<2x8x32xf32>
    %cst = arith.constant dense<0.000000e+00> : vector<2x8xf32>
    %5 = vector.multi_reduction <add>, %4, %cst [2] : vector<2x8x32xf32> to vector<2x8xf32>
    %6 = vector.shape_cast %5 : vector<2x8xf32> to vector<2x8x1xf32>
    %cst_8 = arith.constant dense<0xFF800000> : vector<2x1xf32>
    %7 = vector.multi_reduction <maximumf>, %6, %cst_8 [1] : vector<2x8x1xf32> to vector<2x1xf32>
    %8 = vector.shape_cast %7 : vector<2x1xf32> to vector<2x1x1xf32>
    %9 = vector.broadcast %8 : vector<2x1x1xf32> to vector<2x8x1xf32>
    %10 = arith.subf %6, %9 : vector<2x8x1xf32>
    %11 = math.exp %10 : vector<2x8x1xf32>
    %cst_9 = arith.constant dense<0.000000e+00> : vector<2x1xf32>
    %12 = vector.multi_reduction <add>, %11, %cst_9 [1] : vector<2x8x1xf32> to vector<2x1xf32>
    %13 = vector.shape_cast %12 : vector<2x1xf32> to vector<2x1x1xf32>
    %14 = vector.broadcast %13 : vector<2x1x1xf32> to vector<2x8x1xf32>
    %15 = arith.divf %11, %14 : vector<2x8x1xf32>
    %16 = vector.broadcast %15 : vector<2x8x1xf32> to vector<2x8x32xf32>
    %17 = arith.mulf %16, %2 : vector<2x8x32xf32>
    %cst_10 = arith.constant dense<0.000000e+00> : vector<2x32xf32>
    %18 = vector.multi_reduction <add>, %17, %cst_10 [1] : vector<2x8x32xf32> to vector<2x32xf32>
    %19 = vector.shape_cast %18 : vector<2x32xf32> to vector<2x1x32xf32>
    %c0_11 = arith.constant 0 : index
    %c0_12 = arith.constant 0 : index
    %c0_13 = arith.constant 0 : index
    %20 = vector.load %arg4[%c0_11, %c0_12, %c0_13] : memref<2x1x32xf32, #tpu.memory_space<vmem>>, vector<2x1x32xf32>
    tpu.vector_store %arg4[%c0_11, %c0_12, %c0_13], %19 {strides = array<i32>} : memref<2x1x32xf32, #tpu.memory_space<vmem>>, vector<2x1x32xf32>,
    return
  }
  func.func @transform_0(%arg0: i32) -> (i32, i32, i32) {
    %c0_i32 = arith.constant 0 : i32
    %c0_i32_0 = arith.constant 0 : i32
    %c0_i32_1 = arith.constant 0 : i32
    return %arg0, %c0_i32, %c0_i32_0 : i32, i32, i32
  }
  func.func @transform_1(%arg0: i32) -> (i32, i32, i32) {
    %c0_i32 = arith.constant 0 : i32
    %c0_i32_0 = arith.constant 0 : i32
    %c0_i32_1 = arith.constant 0 : i32
    return %arg0, %c0_i32, %c0_i32_0 : i32, i32, i32
  }
  func.func @transform_2(%arg0: i32) -> (i32, i32, i32) {
    %c0_i32 = arith.constant 0 : i32
    %c0_i32_0 = arith.constant 0 : i32
    %c0_i32_1 = arith.constant 0 : i32
    return %arg0, %c0_i32, %c0_i32_0 : i32, i32, i32
  }
  func.func @transform_3(%arg0: i32) -> (i32, i32, i32) {
    %c0_i32 = arith.constant 0 : i32
    %c0_i32_0 = arith.constant 0 : i32
    %c0_i32_1 = arith.constant 0 : i32
    return %arg0, %c0_i32, %c0_i32_0 : i32, i32, i32
  }
}

</mosaic_0001>

<llo_original>
// kernel: tpu_custom_call.1
$region0: #{tpu_custom_call.1}
  #allocation0 [shape = 'u32[]', space=smem, size = 0x4, offset = 0x4, fixed_abs, tag = 'smem constant byte address 0x4 - core index']
  #allocation1 [shape = 'u32[72,128]{1,0:T(1,128)}', space=vmem, size = 0x9000, scoped, tag = 'internal scratch']
  %s0 = inlined_call_operand.hbm [shape: f32[2,1,32], index: 0, kind: input, shape index: {}]
  %s1 = inlined_call_operand.hbm [shape: f32[2,8,32], index: 1, kind: input, shape index: {}]
  %s2 = inlined_call_operand.hbm [shape: f32[2,8,32], index: 2, kind: input, shape index: {}]
  %s3 = inlined_call_operand.hbm [shape: f32[2,1,32], index: 3, kind: output, shape index: {}]
  %s4 = sld [smem:[#allocation0]]
  $region34: #{tpu_custom_call.1} parent=0
    _
  %s6 = ssub.s32 1, %s4
  %s7 = scalar_select 0, %s6, %s4
  $region1: #{tpu_custom_call.1} parent=0
    #allocation2 [shape = 'u8[1024]{0}', space=vmem, size = 0x400, scoped, tag = 'input window, operand 0, single buffered']
    #allocation3 [shape = 's32[1]{0}', space=sflag, size = 0x4, scoped, tag = 'scoped memory for tpu_custom_call.1']
    #allocation4 [shape = 's32[1]{0}', space=sflag, size = 0x4, scoped, tag = 'scoped memory for tpu_custom_call.1']
    #allocation5 [shape = 'u8[8192]{0}', space=vmem, size = 0x2000, scoped, tag = 'input window, operand 1, single buffered']
    #allocation6 [shape = 's32[1]{0}', space=sflag, size = 0x4, scoped, tag = 'scoped memory for tpu_custom_call.1']
    #allocation7 [shape = 'u8[8192]{0}', space=vmem, size = 0x2000, scoped, tag = 'input window, operand 2, single buffered']
    #allocation8 [shape = 'u8[1024]{0}', space=vmem, size = 0x400, scoped, tag = 'output window, operand 0, single buffered']
    %8 = vsyncpa [#allocation3], 0
    %9 = vsyncpa [#allocation6], 0
    %10 = vsyncpa [#allocation4], 0
    // Predicated region
    $region2: #{tpu_custom_call.1} parent=1 // pred_check
      _
    $region3: #{tpu_custom_call.1} parent=1 // pred_check_branch
      %12 = sbr.rel (0) target = $region5
    $region4: #{tpu_custom_call.1} parent=1 // pred_region
      %14 = vsyncadd [#allocation3], 0
      %s15 = sshll.u32 %s0, 4
      %s16 = int_to_ptr.hbm [resolvable:$true] %s15
      %s17 = sshll.u32 [#allocation2], 4
      %s18 = int_to_ptr.vmem [resolvable:$true] %s17
      %23 = dma.hbm_to_vmem [thread:$0]  %s16, 32, %s18, [#allocation3], 16, 16, 1
    $region5: #{tpu_custom_call.1} parent=1 // pred_fallthru
      _
    // Predicated region
    $region6: #{tpu_custom_call.1} parent=1 // pred_check
      _
    $region7: #{tpu_custom_call.1} parent=1 // pred_check_branch
      %25 = sbr.rel (0) target = $region9
    $region8: #{tpu_custom_call.1} parent=1 // pred_region
      %27 = vsyncadd [#allocation6], 0
      %s28 = sshll.u32 %s1, 4
      %s29 = int_to_ptr.hbm [resolvable:$true] %s28
      %s30 = sshll.u32 [#allocation5], 4
      %s31 = int_to_ptr.vmem [resolvable:$true] %s30
      %36 = dma.hbm_to_vmem [thread:$0]  %s29, 256, %s31, [#allocation6], 128, 128, 8
    $region9: #{tpu_custom_call.1} parent=1 // pred_fallthru
      _
    // Predicated region
    $region10: #{tpu_custom_call.1} parent=1 // pred_check
      _
    $region11: #{tpu_custom_call.1} parent=1 // pred_check_branch
      %38 = sbr.rel (0) target = $region13
    $region12: #{tpu_custom_call.1} parent=1 // pred_region
      %40 = vsyncadd [#allocation6], 0
      %s41 = sshll.u32 %s2, 4
      %s42 = int_to_ptr.hbm [resolvable:$true] %s41
      %s43 = sshll.u32 [#allocation7], 4
      %s44 = int_to_ptr.vmem [resolvable:$true] %s43
      %49 = dma.hbm_to_vmem [thread:$0]  %s42, 256, %s44, [#allocation6], 128, 128, 8
    $region13: #{tpu_custom_call.1} parent=1 // pred_fallthru
      _
    // Predicated region
    $region14: #{tpu_custom_call.1} parent=1 // pred_check
      _
    $region15: #{tpu_custom_call.1} parent=1 // pred_check_branch
      %51 = sbr.rel (0) target = $region17
    $region16: #{tpu_custom_call.1} parent=1 // pred_region
      %53 = dma.done [#allocation3], 32
    $region17: #{tpu_custom_call.1} parent=1 // pred_fallthru
      _
    // Predicated region
    $region18: #{tpu_custom_call.1} parent=1 // pred_check
      _
    $region19: #{tpu_custom_call.1} parent=1 // pred_check_branch
      %55 = sbr.rel (0) target = $region21
    $region20: #{tpu_custom_call.1} parent=1 // pred_region
      %57 = dma.done [#allocation6], 256
    $region21: #{tpu_custom_call.1} parent=1 // pred_fallthru
      _
    // Predicated region
    $region22: #{tpu_custom_call.1} parent=1 // pred_check
      _
    $region23: #{tpu_custom_call.1} parent=1 // pred_check_branch
      %59 = sbr.rel (0) target = $region25
    $region24: #{tpu_custom_call.1} parent=1 // pred_region
      %61 = dma.done [#allocation6], 256
    $region25: #{tpu_custom_call.1} parent=1 // pred_fallthru
      _
    %v62 = vld [vmem:[#allocation2] sm:$0x1]
    %v63 = vld [vmem:[#allocation2 + $0x1] sm:$0x1]
    %v64 = vld [vmem:[#allocation5] sm:$0xff]
    %v65 = vld [vmem:[#allocation5 + $0x8] sm:$0xff]
    %v66 = vld [vmem:[#allocation7] sm:$0xff]
    %v67 = vld [vmem:[#allocation7 + $0x8] sm:$0xff]
    %v70 = vperm.slane %v62, 0
    %v71 = vperm.slane %v63, 0
    %v74 = vmul.f32 %v70, %v64
    %v75 = vmul.f32 %v71, %v65
    %vm76 = vcmask 261120
    %v77 = vsel %vm76, %v74, 0.0
    %78 = vadd.xlane.f32.xlu0 %v77
    %v79 = vpop.xlane.xlu0 %78
    %v80 = vsel %vm76, %v75, 0.0
    %81 = vadd.xlane.f32.xlu0 %v80
    %v82 = vpop.xlane.xlu0 %81
    %v83 = vrot.slane %v79, 4
    %v84 = vmax.f32 %v79, %v83
    %v85 = vrot.slane %v84, 2
    %v86 = vmax.f32 %v84, %v85
    %v87 = vrot.slane %v86, 1
    %v88 = vmax.f32 %v86, %v87
    %v89 = vrot.slane %v82, 4
    %v90 = vmax.f32 %v82, %v89
    %v91 = vrot.slane %v90, 2
    %v92 = vmax.f32 %v90, %v91
    %v93 = vrot.slane %v92, 1
    %v94 = vmax.f32 %v92, %v93
    %v95 = vsub.f32 %v79, %v88
    %v96 = vsub.f32 %v82, %v94
    %v97 = vmul.f32 %v95, 1.442695
    %v98 = vpow.pop %v97
    %v99 = vmul.f32 %v96, 1.442695
    %v100 = vpow.pop %v99
    %v101 = vrot.slane %v98, 4
    %v102 = vadd.f32 %v98, %v101
    %v103 = vrot.slane %v102, 2
    %v104 = vadd.f32 %v102, %v103
    %v105 = vrot.slane %v104, 1
    %v106 = vadd.f32 %v104, %v105
    %v107 = vrot.slane %v100, 4
    %v108 = vadd.f32 %v100, %v107
    %v109 = vrot.slane %v108, 2
    %v110 = vadd.f32 %v108, %v109
    %v111 = vrot.slane %v110, 1
    %v112 = vadd.f32 %v110, %v111
    %v113 = vrcp.pop %v106
    %v114 = vmul.f32 %v106, %v113
    %v115 = vsub.f32 1.0, %v114
    %v116 = vmul.f32 %v113, %v115
    %v117 = vadd.f32 %v113, %v116
    %vm118 = vweird.f32 %v106
    %vm119 = vweird.f32 %v113
    %vm120 = vmor %vm118, %vm119
    %v121 = vsel %vm120, %v113, %v117
    %v122 = vand.u32 2147483647, %v106
    %vm123 = vcmp.eq.f32.partialorder %v122, 8.507059e+37
    %v124 = vand.u32 %v106, 2147483648
    %v125 = vor.u32 1.1754944e-38, %v124
    %v126 = vsel %vm123, %v125, %v121
    %v127 = vmul.f32 %v98, %v126
    %v128 = vrcp.pop %v112
    %v129 = vmul.f32 %v112, %v128
    %v130 = vsub.f32 1.0, %v129
    %v131 = vmul.f32 %v128, %v130
    %v132 = vadd.f32 %v128, %v131
    %vm133 = vweird.f32 %v112
    %vm134 = vweird.f32 %v128
    %vm135 = vmor %vm133, %vm134
    %v136 = vsel %vm135, %v128, %v132
    %v137 = vand.u32 2147483647, %v112
    %vm138 = vcmp.eq.f32.partialorder %v137, 8.507059e+37
    %v139 = vand.u32 %v112, 2147483648
    %v140 = vor.u32 1.1754944e-38, %v139
    %v141 = vsel %vm138, %v140, %v136
    %v142 = vmul.f32 %v100, %v141
    %v143 = vmul.f32 %v127, %v66
    %v144 = vmul.f32 %v142, %v67
    %v145 = vsel %vm76, %v143, 0.0
    %v146 = vrot.slane %v145, 4
    %v147 = vadd.f32 %v145, %v146
    %v148 = vrot.slane %v147, 2
    %v149 = vadd.f32 %v147, %v148
    %v150 = vrot.slane %v149, 1
    %v151 = vadd.f32 %v149, %v150
    %v152 = vsel %vm76, %v144, 0.0
    %v153 = vrot.slane %v152, 4
    %v154 = vadd.f32 %v152, %v153
    %v155 = vrot.slane %v154, 2
    %v156 = vadd.f32 %v154, %v155
    %v157 = vrot.slane %v156, 1
    %v158 = vadd.f32 %v156, %v157
    %vm159 = vcmask 253952
    %160 = vst.msk [vmem:[#allocation8] sm:$0x1] %vm159, %v151
    %161 = vst.msk [vmem:[#allocation8 + $0x1] sm:$0x1] %vm159, %v158
    // Predicated region
    $region26: #{tpu_custom_call.1} parent=1 // pred_check
      _
    $region27: #{tpu_custom_call.1} parent=1 // pred_check_branch
      %163 = sbr.rel (0) target = $region29
    $region28: #{tpu_custom_call.1} parent=1 // pred_region
      %165 = vsyncadd [#allocation4], 0
      %s166 = sshll.u32 [#allocation8], 4
      %s167 = int_to_ptr.vmem [resolvable:$true] %s166
      %s168 = sshll.u32 %s3, 4
      %s169 = int_to_ptr.hbm [resolvable:$true] %s168
      %174 = dma.vmem_to_hbm [thread:$0]  %s167, 32, %s169, [#allocation4], 16, 16, 1
    $region29: #{tpu_custom_call.1} parent=1 // pred_fallthru
      _
    // Predicated region
    $region30: #{tpu_custom_call.1} parent=1 // pred_check
      _
    $region31: #{tpu_custom_call.1} parent=1 // pred_check_branch
      %176 = sbr.rel (0) target = $region33
    $region32: #{tpu_custom_call.1} parent=1 // pred_region
      %178 = dma.done [#allocation4], 32
    $region33: #{tpu_custom_call.1} parent=1 // pred_fallthru
      _
    %179 = vsyncpa [#allocation3], 1
    %180 = vsyncpa [#allocation6], 1
    %181 = vsyncpa [#allocation4], 1

</llo_original>
